<compile_context>
chip_gen: v7x
topology: tpu7x:2x2x1
jax: 0.10.0
libtpu: 0.0.40
codegen_flags: <defaults>
</compile_context>

<pallas_src>
import jax
import jax.numpy as jnp
from jax.experimental import pallas as pl
from jax.experimental.pallas import tpu as pltpu


# ---------------------------------------------------------------------------
# Kernels
# ---------------------------------------------------------------------------
def _affinity_kernel(x1_ref, x2_ref, w1_ref, b1_ref, w2_ref, b2_ref, wdr_ref,
                     s_ref):
    # x1_ref: (1, C1, T)   x2_ref: (1, C2, T)
    # w1_ref: (C1, C1)  b1_ref: (C1, 1)  w2_ref: (C2, C2)  b2_ref: (C2, 1)
    # wdr_ref: (C2, 1)
    # s_ref:  (1, C1, 1)  output block, resident across the t (reduction) axis
    t = pl.program_id(1)

    @pl.when(t == 0)
    def _():
        s_ref[...] = jnp.zeros_like(s_ref)

    x1 = x1_ref[0]                                            # (C1, T)
    x2 = x2_ref[0]                                            # (C2, T)

    # 1x1x1 conv (+ folded BN) + sigmoid for both streams.
    t1 = jax.nn.sigmoid(
        jnp.dot(w1_ref[...], x1, preferred_element_type=jnp.float32)
        + b1_ref[...])                                        # (C1, T)
    t2 = jax.nn.sigmoid(
        jnp.dot(w2_ref[...], x2, preferred_element_type=jnp.float32)
        + b2_ref[...])                                        # (C2, T)

    # dim_reduce (Conv1d C2->1, no bias) folded into the affinity contraction:
    #   v[t]  = sum_c w_dr[c] * t2[c, t]        (VPU mul + sublane reduce)
    #   s[j] += sum_t t1[j, t] * v[t]           (VPU mul + lane reduce)
    v = jnp.sum(wdr_ref[...] * t2, axis=0, keepdims=True)     # (1, T)
    s_ref[0] += jnp.sum(t1 * v, axis=1, keepdims=True)        # (C1, 1)


def _scale_kernel(s_ref, x1_ref, o_ref):
    # s_ref: (1, C1, 1)   x1_ref / o_ref: (1, C1, T) lane-dense
    o_ref[0] = (x1_ref[0] * s_ref[0]).astype(o_ref.dtype)


# ---------------------------------------------------------------------------
# Wrapper
# ---------------------------------------------------------------------------
def _fold_bn(w, b, gamma, beta, mean, var, eps=1e-5):
    """Fold eval-mode BatchNorm into a 1x1 conv (f32)."""
    w = w.astype(jnp.float32)
    b = b.astype(jnp.float32)
    scale = gamma.astype(jnp.float32) / jnp.sqrt(var.astype(jnp.float32) + eps)
    w_f = w * scale[:, None]
    b_f = (b - mean.astype(jnp.float32)) * scale + beta.astype(jnp.float32)
    return w_f, b_f


def _pick_tile(s, max_tile):
    """Largest multiple of 128 that divides s (<= max_tile); fallback: s."""
    best = None
    t = 128
    while t <= min(s, max_tile):
        if s % t == 0:
            best = t
        t += 128
    return best if best is not None else s


def spectral_enhance_forward(x1, x2, params, max_tile_s=2048):
    """x1: (N, C1, H, W, L), x2: (N, C2, H, W, L). Returns x1 * affinity."""
    N, C1 = x1.shape[0], x1.shape[1]
    C2 = x2.shape[1]
    S = 1
    for d in x1.shape[2:]:
        S *= d
    assert x2.shape[0] == N and tuple(x2.shape[2:]) == tuple(x1.shape[2:])

    x1f = x1.reshape(N, C1, S)
    x2f = x2.reshape(N, C2, S)

    # Fold BN into the 1x1x1 convs (f32, wrapper side).
    w1, b1 = _fold_bn(params["t1_w"], params["t1_b"], params["t1_gamma"],
                      params["t1_beta"], params["t1_mean"], params["t1_var"])
    w2, b2 = _fold_bn(params["t2_w"], params["t2_b"], params["t2_gamma"],
                      params["t2_beta"], params["t2_mean"], params["t2_var"])
    b1 = b1.reshape(C1, 1)
    b2 = b2.reshape(C2, 1)
    wdr = params["dr_w"].reshape(C2, 1).astype(jnp.float32)

    tile = _pick_tile(S, max_tile_s)
    n_tiles = S // tile

    # ---- Pass 1: per-batch channel attention vector s = (N, C1, 1) ----------
    s = pl.pallas_call(
        _affinity_kernel,
        out_shape=jax.ShapeDtypeStruct((N, C1, 1), jnp.float32),
        grid_spec=pltpu.PrefetchScalarGridSpec(
            num_scalar_prefetch=0,
            grid=(N, n_tiles),
            in_specs=[
                pl.BlockSpec((1, C1, tile), lambda n, t: (n, 0, t)),
                pl.BlockSpec((1, C2, tile), lambda n, t: (n, 0, t)),
                pl.BlockSpec((C1, C1), lambda n, t: (0, 0)),   # resident
                pl.BlockSpec((C1, 1), lambda n, t: (0, 0)),    # resident
                pl.BlockSpec((C2, C2), lambda n, t: (0, 0)),   # resident
                pl.BlockSpec((C2, 1), lambda n, t: (0, 0)),    # resident
                pl.BlockSpec((C2, 1), lambda n, t: (0, 0)),    # resident
            ],
            out_specs=pl.BlockSpec((1, C1, 1), lambda n, t: (n, 0, 0)),
        ),
        compiler_params=pltpu.CompilerParams(
            dimension_semantics=("parallel", "arbitrary"),
            vmem_limit_bytes=32 << 20,
        ),
    )(x1f, x2f, w1, b1, w2, b2, wdr)

    # ---- Pass 2: out = x1 * s (lane-dense elementwise scale) ----------------
    out = pl.pallas_call(
        _scale_kernel,
        out_shape=jax.ShapeDtypeStruct((N, C1, S), x1.dtype),
        grid_spec=pltpu.PrefetchScalarGridSpec(
            num_scalar_prefetch=0,
            grid=(N, n_tiles),
            in_specs=[
                pl.BlockSpec((1, C1, 1), lambda n, t: (n, 0, 0)),
                pl.BlockSpec((1, C1, tile), lambda n, t: (n, 0, t)),
            ],
            out_specs=pl.BlockSpec((1, C1, tile), lambda n, t: (n, 0, t)),
        ),
        compiler_params=pltpu.CompilerParams(
            dimension_semantics=("parallel", "parallel"),
            vmem_limit_bytes=32 << 20,
        ),
    )(s, x1f)

    return out.reshape(x1.shape)


# ---------------------------------------------------------------------------
# Pure-JAX reference (mirrors the PyTorch forward in eval mode)
# ---------------------------------------------------------------------------
def reference_forward(x1, x2, params, eps=1e-5):
    N, C1 = x1.shape[0], x1.shape[1]
    C2 = x2.shape[1]
    S = 1
    for d in x1.shape[2:]:
        S *= d
    x1f = x1.reshape(N, C1, S)
    x2f = x2.reshape(N, C2, S)

    def conv_bn_sig(xf, w, b, gamma, beta, mean, var):
        y = jnp.einsum("oc,ncs->nos", w, xf) + b[None, :, None]
        y = (y - mean[None, :, None]) / jnp.sqrt(var[None, :, None] + eps)
        y = y * gamma[None, :, None] + beta[None, :, None]
        return jax.nn.sigmoid(y)

    t1 = conv_bn_sig(x1f, params["t1_w"], params["t1_b"], params["t1_gamma"],
                     params["t1_beta"], params["t1_mean"], params["t1_var"])
    t2 = conv_bn_sig(x2f, params["t2_w"], params["t2_b"], params["t2_gamma"],
                     params["t2_beta"], params["t2_mean"], params["t2_var"])
    A = jnp.einsum("nis,njs->nij", t1, t2)                    # (N, C1, C2)
    s = jnp.einsum("nij,j->ni", A, params["dr_w"].reshape(C2))
    return x1 * s[:, :, None, None, None]


# ---------------------------------------------------------------------------
if __name__ == "__main__":
    key = jax.random.PRNGKey(0)
    k = jax.random.split(key, 16)

    N, C1, C2 = 2, 4, 6
    H, W, L = 8, 8, 8          # S = 512 (multiple of 128)

    x1 = jax.random.normal(k[0], (N, C1, H, W, L), dtype=jnp.float32)
    x2 = jax.random.normal(k[1], (N, C2, H, W, L), dtype=jnp.float32)

    params = dict(
        # T1: Conv3d(C1 -> C1, k=1) + BN3d(C1) + Sigmoid
        t1_w=jax.random.normal(k[2], (C1, C1), dtype=jnp.float32) * 0.2,
        t1_b=jax.random.normal(k[3], (C1,), dtype=jnp.float32) * 0.1,
        t1_gamma=jnp.abs(jax.random.normal(k[4], (C1,), dtype=jnp.float32)) + 0.5,
        t1_beta=jax.random.normal(k[5], (C1,), dtype=jnp.float32) * 0.1,
        t1_mean=jax.random.normal(k[6], (C1,), dtype=jnp.float32) * 0.1,
        t1_var=jnp.abs(jax.random.normal(k[7], (C1,), dtype=jnp.float32)) + 0.5,
        # T2: Conv3d(C2 -> C2, k=1) + BN3d(C2) + Sigmoid
        t2_w=jax.random.normal(k[8], (C2, C2), dtype=jnp.float32) * 0.2,
        t2_b=jax.random.normal(k[9], (C2,), dtype=jnp.float32) * 0.1,
        t2_gamma=jnp.abs(jax.random.normal(k[10], (C2,), dtype=jnp.float32)) + 0.5,
        t2_beta=jax.random.normal(k[11], (C2,), dtype=jnp.float32) * 0.1,
        t2_mean=jax.random.normal(k[12], (C2,), dtype=jnp.float32) * 0.1,
        t2_var=jnp.abs(jax.random.normal(k[13], (C2,), dtype=jnp.float32)) + 0.5,
        # dim_reduce: Conv1d(C2 -> 1, k=1, bias=False)
        dr_w=jax.random.normal(k[14], (C2,), dtype=jnp.float32) * 0.1,
    )

    # max_tile_s=256 exercises the multi-tile reduction path (2 tiles/batch).
    out = spectral_enhance_forward(x1, x2, params, max_tile_s=256)
    jax.block_until_ready(out)

    ref = reference_forward(x1, x2, params)
    assert out.shape == ref.shape
    assert jnp.allclose(out, ref, rtol=1e-4, atol=1e-3), (
        "mismatch vs reference: max abs err = "
        f"{float(jnp.max(jnp.abs(out - ref)))}")

    print("KERNEL_OK")
</pallas_src>

<mosaic_0001>
module attributes {stable_mosaic.version = 11 : i64} {
  func.func @_affinity_kernel(%arg0: i32, %arg1: i32, %arg2: memref<1x4x256xf32, #tpu.memory_space<vmem>>, %arg3: memref<1x6x256xf32, #tpu.memory_space<vmem>>, %arg4: memref<4x4xf32, #tpu.memory_space<vmem>>, %arg5: memref<4x1xf32, #tpu.memory_space<vmem>>, %arg6: memref<6x6xf32, #tpu.memory_space<vmem>>, %arg7: memref<6x1xf32, #tpu.memory_space<vmem>>, %arg8: memref<6x1xf32, #tpu.memory_space<vmem>>, %arg9: memref<1x4x1xf32, #tpu.memory_space<vmem>>) attributes {dimension_semantics = [#tpu.dimension_semantics<parallel>, #tpu.dimension_semantics<arbitrary>], iteration_bounds = array<i64: 2, 2>, scalar_prefetch = 0 : i64, scratch_operands = 0 : i64, tpu.core_type = #tpu.core_type<tc>, window_params = [{transform_indices = @transform_0, window_bounds = array<i64: 1, 4, 256>}, {transform_indices = @transform_1, window_bounds = array<i64: 1, 6, 256>}, {pipeline_mode = #tpu.pipeline_mode<synchronous>, transform_indices = @transform_2, window_bounds = array<i64: 4, 4>}, {pipeline_mode = #tpu.pipeline_mode<synchronous>, transform_indices = @transform_3, window_bounds = array<i64: 4, 1>}, {pipeline_mode = #tpu.pipeline_mode<synchronous>, transform_indices = @transform_4, window_bounds = array<i64: 6, 6>}, {pipeline_mode = #tpu.pipeline_mode<synchronous>, transform_indices = @transform_5, window_bounds = array<i64: 6, 1>}, {pipeline_mode = #tpu.pipeline_mode<synchronous>, transform_indices = @transform_6, window_bounds = array<i64: 6, 1>}, {transform_indices = @transform_7, window_bounds = array<i64: 1, 4, 1>}]} {
    %c0_i32 = arith.constant 0 : i32
    %0 = arith.cmpi eq, %arg1, %c0_i32 : i32
    %1 = arith.extui %0 : i1 to i32
    %c0_i32_0 = arith.constant 0 : i32
    %2 = arith.cmpi ne, %1, %c0_i32_0 : i32
    scf.if %2 {
      %cst_27 = arith.constant 0.000000e+00 : f32
      %42 = vector.broadcast %cst_27 : f32 to vector<1x4x1xf32>
      %c0_28 = arith.constant 0 : index
      %c0_29 = arith.constant 0 : index
      %c0_30 = arith.constant 0 : index
      %43 = vector.load %arg9[%c0_28, %c0_29, %c0_30] : memref<1x4x1xf32, #tpu.memory_space<vmem>>, vector<1x4x1xf32>
      tpu.vector_store %arg9[%c0_28, %c0_29, %c0_30], %42 {strides = array<i32>} : memref<1x4x1xf32, #tpu.memory_space<vmem>>, vector<1x4x1xf32>,
    } else {
    }
    %c0 = arith.constant 0 : index
    %c0_1 = arith.constant 0 : index
    %c0_2 = arith.constant 0 : index
    %3 = vector.load %arg2[%c0, %c0_1, %c0_2] : memref<1x4x256xf32, #tpu.memory_space<vmem>>, vector<1x4x256xf32>
    %4 = vector.shape_cast %3 : vector<1x4x256xf32> to vector<4x256xf32>
    %c0_3 = arith.constant 0 : index
    %c0_4 = arith.constant 0 : index
    %c0_5 = arith.constant 0 : index
    %5 = vector.load %arg3[%c0_3, %c0_4, %c0_5] : memref<1x6x256xf32, #tpu.memory_space<vmem>>, vector<1x6x256xf32>
    %6 = vector.shape_cast %5 : vector<1x6x256xf32> to vector<6x256xf32>
    %c0_6 = arith.constant 0 : index
    %c0_7 = arith.constant 0 : index
    %7 = vector.load %arg4[%c0_6, %c0_7] : memref<4x4xf32, #tpu.memory_space<vmem>>, vector<4x4xf32>
    %cst = arith.constant dense<0.000000e+00> : vector<4x256xf32>
    %8 = tpu.matmul %7, %4, %cst {dimension_numbers = #tpu.dot_dimension_numbers<[1], [0], [0], [1], [0, 0, 1, 1], [], []>} : vector<4x4xf32>, vector<4x256xf32>, vector<4x256xf32> -> vector<4x256xf32>
    %c0_8 = arith.constant 0 : index
    %c0_9 = arith.constant 0 : index
    %9 = vector.load %arg5[%c0_8, %c0_9] : memref<4x1xf32, #tpu.memory_space<vmem>>, vector<4x1xf32>
    %10 = vector.broadcast %9 : vector<4x1xf32> to vector<4x256xf32>
    %11 = arith.addf %8, %10 : vector<4x256xf32>
    %12 = arith.negf %11 : vector<4x256xf32>
    %13 = math.exp %12 : vector<4x256xf32>
    %cst_10 = arith.constant 1.000000e+00 : f32
    %14 = vector.broadcast %cst_10 : f32 to vector<4x256xf32>
    %15 = arith.addf %14, %13 : vector<4x256xf32>
    %16 = arith.divf %14, %15 : vector<4x256xf32>
    %c0_11 = arith.constant 0 : index
    %c0_12 = arith.constant 0 : index
    %17 = vector.load %arg6[%c0_11, %c0_12] : memref<6x6xf32, #tpu.memory_space<vmem>>, vector<6x6xf32>
    %cst_13 = arith.constant dense<0.000000e+00> : vector<6x256xf32>
    %18 = tpu.matmul %17, %6, %cst_13 {dimension_numbers = #tpu.dot_dimension_numbers<[1], [0], [0], [1], [0, 0, 1, 1], [], []>} : vector<6x6xf32>, vector<6x256xf32>, vector<6x256xf32> -> vector<6x256xf32>
    %c0_14 = arith.constant 0 : index
    %c0_15 = arith.constant 0 : index
    %19 = vector.load %arg7[%c0_14, %c0_15] : memref<6x1xf32, #tpu.memory_space<vmem>>, vector<6x1xf32>
    %20 = vector.broadcast %19 : vector<6x1xf32> to vector<6x256xf32>
    %21 = arith.addf %18, %20 : vector<6x256xf32>
    %22 = arith.negf %21 : vector<6x256xf32>
    %23 = math.exp %22 : vector<6x256xf32>
    %cst_16 = arith.constant 1.000000e+00 : f32
    %24 = vector.broadcast %cst_16 : f32 to vector<6x256xf32>
    %25 = arith.addf %24, %23 : vector<6x256xf32>
    %26 = arith.divf %24, %25 : vector<6x256xf32>
    %c0_17 = arith.constant 0 : index
    %c0_18 = arith.constant 0 : index
    %27 = vector.load %arg8[%c0_17, %c0_18] : memref<6x1xf32, #tpu.memory_space<vmem>>, vector<6x1xf32>
    %28 = vector.broadcast %27 : vector<6x1xf32> to vector<6x256xf32>
    %29 = arith.mulf %28, %26 : vector<6x256xf32>
    %cst_19 = arith.constant dense<0.000000e+00> : vector<256xf32>
    %30 = vector.multi_reduction <add>, %29, %cst_19 [0] : vector<6x256xf32> to vector<256xf32>
    %31 = vector.shape_cast %30 : vector<256xf32> to vector<1x256xf32>
    %c0_20 = arith.constant 0 : index
    %c0_21 = arith.constant 0 : index
    %c0_22 = arith.constant 0 : index
    %32 = vector.load %arg9[%c0_20, %c0_21, %c0_22] : memref<1x4x1xf32, #tpu.memory_space<vmem>>, vector<1x4x1xf32>
    %33 = vector.shape_cast %32 : vector<1x4x1xf32> to vector<4x1xf32>
    %34 = vector.broadcast %31 : vector<1x256xf32> to vector<4x256xf32>
    %35 = arith.mulf %16, %34 : vector<4x256xf32>
    %cst_23 = arith.constant dense<0.000000e+00> : vector<4xf32>
    %36 = vector.multi_reduction <add>, %35, %cst_23 [1] : vector<4x256xf32> to vector<4xf32>
    %37 = vector.shape_cast %36 : vector<4xf32> to vector<4x1xf32>
    %38 = arith.addf %33, %37 : vector<4x1xf32>
    %c0_24 = arith.constant 0 : index
    %c0_25 = arith.constant 0 : index
    %c0_26 = arith.constant 0 : index
    %39 = vector.load %arg9[%c0_24, %c0_25, %c0_26] : memref<1x4x1xf32, #tpu.memory_space<vmem>>, vector<1x4x1xf32>
    %40 = vector.shape_cast %39 : vector<1x4x1xf32> to vector<4x1xf32>
    %41 = vector.shape_cast %38 : vector<4x1xf32> to vector<1x4x1xf32>
    tpu.vector_store %arg9[%c0_24, %c0_25, %c0_26], %41 {strides = array<i32>} : memref<1x4x1xf32, #tpu.memory_space<vmem>>, vector<1x4x1xf32>,
    return
  }
  func.func @transform_0(%arg0: i32, %arg1: i32) -> (i32, i32, i32) {
    %c0_i32 = arith.constant 0 : i32
    %c0_i32_0 = arith.constant 0 : i32
    return %arg0, %c0_i32, %arg1 : i32, i32, i32
  }
  func.func @transform_1(%arg0: i32, %arg1: i32) -> (i32, i32, i32) {
    %c0_i32 = arith.constant 0 : i32
    %c0_i32_0 = arith.constant 0 : i32
    return %arg0, %c0_i32, %arg1 : i32, i32, i32
  }
  func.func @transform_2(%arg0: i32, %arg1: i32) -> (i32, i32) {
    %c0_i32 = arith.constant 0 : i32
    %c0_i32_0 = arith.constant 0 : i32
    %c0_i32_1 = arith.constant 0 : i32
    return %c0_i32, %c0_i32_0 : i32, i32
  }
  func.func @transform_3(%arg0: i32, %arg1: i32) -> (i32, i32) {
    %c0_i32 = arith.constant 0 : i32
    %c0_i32_0 = arith.constant 0 : i32
    %c0_i32_1 = arith.constant 0 : i32
    return %c0_i32, %c0_i32_0 : i32, i32
  }
  func.func @transform_4(%arg0: i32, %arg1: i32) -> (i32, i32) {
    %c0_i32 = arith.constant 0 : i32
    %c0_i32_0 = arith.constant 0 : i32
    %c0_i32_1 = arith.constant 0 : i32
    return %c0_i32, %c0_i32_0 : i32, i32
  }
  func.func @transform_5(%arg0: i32, %arg1: i32) -> (i32, i32) {
    %c0_i32 = arith.constant 0 : i32
    %c0_i32_0 = arith.constant 0 : i32
    %c0_i32_1 = arith.constant 0 : i32
    return %c0_i32, %c0_i32_0 : i32, i32
  }
  func.func @transform_6(%arg0: i32, %arg1: i32) -> (i32, i32) {
    %c0_i32 = arith.constant 0 : i32
    %c0_i32_0 = arith.constant 0 : i32
    %c0_i32_1 = arith.constant 0 : i32
    return %c0_i32, %c0_i32_0 : i32, i32
  }
  func.func @transform_7(%arg0: i32, %arg1: i32) -> (i32, i32, i32) {
    %c0_i32 = arith.constant 0 : i32
    %c0_i32_0 = arith.constant 0 : i32
    %c0_i32_1 = arith.constant 0 : i32
    return %arg0, %c0_i32, %c0_i32_0 : i32, i32, i32
  }
}

</mosaic_0001>

<llo_original>
// kernel: tpu_custom_call.1
$region0: #{tpu_custom_call.1}
  #allocation0 [shape = 'u32[]', space=smem, size = 0x4, offset = 0x4, fixed_abs, tag = 'smem constant byte address 0x4 - core index']
  #allocation1 [shape = 'u32[144,128]{1,0:T(1,128)}', space=vmem, size = 0x12000, scoped, tag = 'internal scratch']
  %s0 = inlined_call_operand.vmem [shape: f32[2,4,512], index: 0, kind: input, shape index: {}]
  %s1 = inlined_call_operand.vmem [shape: f32[2,6,512], index: 1, kind: input, shape index: {}]
  %s2 = inlined_call_operand.vmem [shape: f32[4,4], index: 2, kind: input, shape index: {}]
  %s3 = inlined_call_operand.vmem [shape: f32[4,1], index: 3, kind: input, shape index: {}]
  %s4 = inlined_call_operand.vmem [shape: f32[6,6], index: 4, kind: input, shape index: {}]
  %s5 = inlined_call_operand.vmem [shape: f32[6,1], index: 5, kind: input, shape index: {}]
  %s6 = inlined_call_operand.vmem [shape: f32[6,1], index: 6, kind: input, shape index: {}]
  %s7 = inlined_call_operand.vmem [shape: f32[2,4,1], index: 7, kind: output, shape index: {}]
  %s8 = sld [smem:[#allocation0]]
  $region65: #{tpu_custom_call.1} parent=0
    _
  %s10 = ssub.s32 1, %s8
  %s11 = scalar_select 0, %s10, %s8
  loop: start=0, step=1, limit=6
  $region2: #{tpu_custom_call.1} parent=0 // loop_pre_header
    _
  $region3: #{tpu_custom_call.1} parent=0 // loop_header
    %s13 = sphi 0, %s17
    %p14 = scmp.ge.s32.totalorder %s13, 6
    %s20 = sphi 0, %s32
    %s21 = sphi 0, %s28
    %s22 = sphi 0, %s20
    %s23 = sphi 0, %s21
    %s24 = sphi 0, %s22
    %s25 = sphi 0, %s23
    %s37 = sphi 0, %s39
    %s40 = sphi 0, %s37
    %s41 = sphi 0, %s40
    %s57 = sphi 0, %s41
    %s65 = sphi 0, %s67
    %s68 = sphi 0, %s65
    %s69 = sphi 0, %s68
    %s85 = sphi 0, %s69
    %s89 = sphi 0, %s89
    %s91 = sphi 0, %s89
    %s92 = sphi 0, %s91
    %s106 = sphi 0, %s92
    %s110 = sphi 0, %s110
    %s112 = sphi 0, %s110
    %s113 = sphi 0, %s112
    %s127 = sphi 0, %s113
    %s131 = sphi 0, %s131
    %s133 = sphi 0, %s131
    %s134 = sphi 0, %s133
    %s148 = sphi 0, %s134
    %s152 = sphi 0, %s152
    %s154 = sphi 0, %s152
    %s155 = sphi 0, %s154
    %s169 = sphi 0, %s155
    %s173 = sphi 0, %s173
    %s175 = sphi 0, %s173
    %s176 = sphi 0, %s175
    %s190 = sphi 0, %s176
    %s196 = sphi 0, %s198
    %s199 = sphi 0, %s196
    %s200 = sphi 0, %s199
    %s216 = sphi 0, %s200
  $region4: #{tpu_custom_call.1} parent=0 // loop_header_branch
    %16 = sbr.rel (%p14) target = $region8
  $region5: #{tpu_custom_call.1} parent=0 // loop_body
    %s18 = ssub.s32 %s13, 1
    %s19 = ssub.s32 %s13, 2
    %s26 = sadd.s32 1, %s21
    %p27 = scmp.ge.s32.totalorder %s26, 2
    %s28 = scalar_select %p27, 0, %s26
    %s29 = sadd.s32 1, %s20
    %s30 = scalar_select %p27, %s29, %s20
    %p31 = scmp.ge.s32.totalorder %s30, 2
    %s32 = scalar_select %p31, 0, %s30
    %s33 = ssub.s32 %s20, %s32
    %s34 = ssub.s32 %s21, %s28
    %s35 = sor.u32 %s33, %s34
    %p36 = scmp.eq.s32.totalorder %s35, 0
    %s38 = sadd.s32 %s37, 1
    %s39 = scalar_select %p36, %s37, %s38
    %p42 = pneg %p36
    %p43 = scmp.eq.s32.totalorder %s13, 3
    %p44 = por %p42, %p43
    %p45 = scmp.ne.s32.totalorder %s37, %s40
    %p46 = scmp.eq.s32.totalorder %s13, 0
    %p47 = por %p45, %p46
    %p48 = scmp.ne.s32.totalorder %s37, %s40
    %p49 = scmp.eq.s32.totalorder %s18, 3
    %p50 = por %p48, %p49
    %p51 = scmp.ne.s32.totalorder %s40, %s41
    %p52 = scmp.eq.s32.totalorder %s18, 0
    %p53 = por %p51, %p52
    %p54 = scmp.ne.s32.totalorder %s40, %s41
    %p55 = scmp.eq.s32.totalorder %s19, 3
    %p56 = por %p54, %p55
    %p58 = scmp.ne.s32.totalorder %s41, %s57
    %p59 = scmp.eq.s32.totalorder %s19, 0
    %p60 = por %p58, %p59
    %s61 = ssub.s32 %s20, %s32
    %s62 = ssub.s32 %s21, %s28
    %s63 = sor.u32 %s61, %s62
    %p64 = scmp.eq.s32.totalorder %s63, 0
    %s66 = sadd.s32 %s65, 1
    %s67 = scalar_select %p64, %s65, %s66
    %p70 = pneg %p64
    %p71 = scmp.eq.s32.totalorder %s13, 3
    %p72 = por %p70, %p71
    %p73 = scmp.ne.s32.totalorder %s65, %s68
    %p74 = scmp.eq.s32.totalorder %s13, 0
    %p75 = por %p73, %p74
    %p76 = scmp.ne.s32.totalorder %s65, %s68
    %p77 = scmp.eq.s32.totalorder %s18, 3
    %p78 = por %p76, %p77
    %p79 = scmp.ne.s32.totalorder %s68, %s69
    %p80 = scmp.eq.s32.totalorder %s18, 0
    %p81 = por %p79, %p80
    %p82 = scmp.ne.s32.totalorder %s68, %s69
    %p83 = scmp.eq.s32.totalorder %s19, 3
    %p84 = por %p82, %p83
    %p86 = scmp.ne.s32.totalorder %s69, %s85
    %p87 = scmp.eq.s32.totalorder %s19, 0
    %p88 = por %p86, %p87
    %s90 = sadd.s32 %s89, 1
    %p93 = scmp.eq.s32.totalorder %s13, 3
    %p94 = scmp.ne.s32.totalorder %s89, %s91
    %p95 = scmp.eq.s32.totalorder %s13, 0
    %p96 = por %p94, %p95
    %p97 = scmp.ne.s32.totalorder %s89, %s91
    %p98 = scmp.eq.s32.totalorder %s18, 3
    %p99 = por %p97, %p98
    %p100 = scmp.ne.s32.totalorder %s91, %s92
    %p101 = scmp.eq.s32.totalorder %s18, 0
    %p102 = por %p100, %p101
    %p103 = scmp.ne.s32.totalorder %s91, %s92
    %p104 = scmp.eq.s32.totalorder %s19, 3
    %p105 = por %p103, %p104
    %p107 = scmp.ne.s32.totalorder %s92, %s106
    %p108 = scmp.eq.s32.totalorder %s19, 0
    %p109 = por %p107, %p108
    %s111 = sadd.s32 %s110, 1
    %p114 = scmp.eq.s32.totalorder %s13, 3
    %p115 = scmp.ne.s32.totalorder %s110, %s112
    %p116 = scmp.eq.s32.totalorder %s13, 0
    %p117 = por %p115, %p116
    %p118 = scmp.ne.s32.totalorder %s110, %s112
    %p119 = scmp.eq.s32.totalorder %s18, 3
    %p120 = por %p118, %p119
    %p121 = scmp.ne.s32.totalorder %s112, %s113
    %p122 = scmp.eq.s32.totalorder %s18, 0
    %p123 = por %p121, %p122
    %p124 = scmp.ne.s32.totalorder %s112, %s113
    %p125 = scmp.eq.s32.totalorder %s19, 3
    %p126 = por %p124, %p125
    %p128 = scmp.ne.s32.totalorder %s113, %s127
    %p129 = scmp.eq.s32.totalorder %s19, 0
    %p130 = por %p128, %p129
    %s132 = sadd.s32 %s131, 1
    %p135 = scmp.eq.s32.totalorder %s13, 3
    %p136 = scmp.ne.s32.totalorder %s131, %s133
    %p137 = scmp.eq.s32.totalorder %s13, 0
    %p138 = por %p136, %p137
    %p139 = scmp.ne.s32.totalorder %s131, %s133
    %p140 = scmp.eq.s32.totalorder %s18, 3
    %p141 = por %p139, %p140
    %p142 = scmp.ne.s32.totalorder %s133, %s134
    %p143 = scmp.eq.s32.totalorder %s18, 0
    %p144 = por %p142, %p143
    %p145 = scmp.ne.s32.totalorder %s133, %s134
    %p146 = scmp.eq.s32.totalorder %s19, 3
    %p147 = por %p145, %p146
    %p149 = scmp.ne.s32.totalorder %s134, %s148
    %p150 = scmp.eq.s32.totalorder %s19, 0
    %p151 = por %p149, %p150
    %s153 = sadd.s32 %s152, 1
    %p156 = scmp.eq.s32.totalorder %s13, 3
    %p157 = scmp.ne.s32.totalorder %s152, %s154
    %p158 = scmp.eq.s32.totalorder %s13, 0
    %p159 = por %p157, %p158
    %p160 = scmp.ne.s32.totalorder %s152, %s154
    %p161 = scmp.eq.s32.totalorder %s18, 3
    %p162 = por %p160, %p161
    %p163 = scmp.ne.s32.totalorder %s154, %s155
    %p164 = scmp.eq.s32.totalorder %s18, 0
    %p165 = por %p163, %p164
    %p166 = scmp.ne.s32.totalorder %s154, %s155
    %p167 = scmp.eq.s32.totalorder %s19, 3
    %p168 = por %p166, %p167
    %p170 = scmp.ne.s32.totalorder %s155, %s169
    %p171 = scmp.eq.s32.totalorder %s19, 0
    %p172 = por %p170, %p171
    %s174 = sadd.s32 %s173, 1
    %p177 = scmp.eq.s32.totalorder %s13, 3
    %p178 = scmp.ne.s32.totalorder %s173, %s175
    %p179 = scmp.eq.s32.totalorder %s13, 0
    %p180 = por %p178, %p179
    %p181 = scmp.ne.s32.totalorder %s173, %s175
    %p182 = scmp.eq.s32.totalorder %s18, 3
    %p183 = por %p181, %p182
    %p184 = scmp.ne.s32.totalorder %s175, %s176
    %p185 = scmp.eq.s32.totalorder %s18, 0
    %p186 = por %p184, %p185
    %p187 = scmp.ne.s32.totalorder %s175, %s176
    %p188 = scmp.eq.s32.totalorder %s19, 3
    %p189 = por %p187, %p188
    %p191 = scmp.ne.s32.totalorder %s176, %s190
    %p192 = scmp.eq.s32.totalorder %s19, 0
    %p193 = por %p191, %p192
    %s194 = ssub.s32 %s20, %s32
    %p195 = scmp.eq.s32.totalorder %s194, 0
    %s197 = sadd.s32 %s196, 1
    %s198 = scalar_select %p195, %s196, %s197
    %p201 = pneg %p195
    %p202 = scmp.eq.s32.totalorder %s13, 3
    %p203 = por %p201, %p202
    %p204 = scmp.ne.s32.totalorder %s196, %s199
    %p205 = scmp.eq.s32.totalorder %s13, 0
    %p206 = por %p204, %p205
    %p207 = scmp.ne.s32.totalorder %s196, %s199
    %p208 = scmp.eq.s32.totalorder %s18, 3
    %p209 = por %p207, %p208
    %p210 = scmp.ne.s32.totalorder %s199, %s200
    %p211 = scmp.eq.s32.totalorder %s18, 0
    %p212 = por %p210, %p211
    %p213 = scmp.ne.s32.totalorder %s199, %s200
    %p214 = scmp.eq.s32.totalorder %s19, 3
    %p215 = por %p213, %p214
    %p217 = scmp.ne.s32.totalorder %s200, %s216
    %p218 = scmp.eq.s32.totalorder %s19, 0
    %p219 = por %p217, %p218
    %p220 = scmp.le.s32.totalorder 1, %s13
    %p221 = scmp.lt.s32.totalorder %s13, 5
    %p222 = pnand %p220, %p221
    %p223 = pneg %p222
    // Predicated region
    $region9: #{tpu_custom_call.1} parent=5 // pred_check
      _
    $region10: #{tpu_custom_call.1} parent=5 // pred_check_branch
      %225 = sbr.rel (%p222) target = $region12
    $region11: #{tpu_custom_call.1} parent=5 // pred_region
      %s226 = ssub.s32 %s13, 1
      // Predicated region
      $region13: #{tpu_custom_call.1} parent=11 // pred_check
        %p227 = pneg %p102
      $region14: #{tpu_custom_call.1} parent=11 // pred_check_branch
        %229 = sbr.rel (%p227) target = $region16
      $region15: #{tpu_custom_call.1} parent=11 // pred_region
        _
      $region16: #{tpu_custom_call.1} parent=11 // pred_fallthru
        _
      // Predicated region
      $region17: #{tpu_custom_call.1} parent=11 // pred_check
        %p230 = pneg %p123
      $region18: #{tpu_custom_call.1} parent=11 // pred_check_branch
        %232 = sbr.rel (%p230) target = $region20
      $region19: #{tpu_custom_call.1} parent=11 // pred_region
        _
      $region20: #{tpu_custom_call.1} parent=11 // pred_fallthru
        _
      // Predicated region
      $region21: #{tpu_custom_call.1} parent=11 // pred_check
        %p233 = pneg %p144
      $region22: #{tpu_custom_call.1} parent=11 // pred_check_branch
        %235 = sbr.rel (%p233) target = $region24
      $region23: #{tpu_custom_call.1} parent=11 // pred_region
        _
      $region24: #{tpu_custom_call.1} parent=11 // pred_fallthru
        _
      // Predicated region
      $region25: #{tpu_custom_call.1} parent=11 // pred_check
        %p236 = pneg %p165
      $region26: #{tpu_custom_call.1} parent=11 // pred_check_branch
        %238 = sbr.rel (%p236) target = $region28
      $region27: #{tpu_custom_call.1} parent=11 // pred_region
        _
      $region28: #{tpu_custom_call.1} parent=11 // pred_fallthru
        _
      // Predicated region
      $region29: #{tpu_custom_call.1} parent=11 // pred_check
        %p239 = pneg %p186
      $region30: #{tpu_custom_call.1} parent=11 // pred_check_branch
        %241 = sbr.rel (%p239) target = $region32
      $region31: #{tpu_custom_call.1} parent=11 // pred_region
        _
      $region32: #{tpu_custom_call.1} parent=11 // pred_fallthru
        _
    $region12: #{tpu_custom_call.1} parent=5 // pred_fallthru
      _
    %p242 = scmp.lt.s32.totalorder %s13, 4
    // Predicated region
    $region33: #{tpu_custom_call.1} parent=5 // pred_check
      %p243 = pneg %p242
    $region34: #{tpu_custom_call.1} parent=5 // pred_check_branch
      %245 = sbr.rel (%p243) target = $region36
    $region35: #{tpu_custom_call.1} parent=5 // pred_region
      // Predicated region
      $region37: #{tpu_custom_call.1} parent=35 // pred_check
        %p246 = pneg %p47
      $region38: #{tpu_custom_call.1} parent=35 // pred_check_branch
        %248 = sbr.rel (%p246) target = $region40
      $region39: #{tpu_custom_call.1} parent=35 // pred_region
        %s249 = smul.u32 2, %s21
        %p250 = scmp.lt.s32.totalorder %s20, 1
        %s251 = scalar_select %p250, %s20, 1
        %p252 = scmp.lt.s32.totalorder %s249, 3
        %s253 = scalar_select %p252, %s249, 3
        %s254 = smul.addr %s251, 4
        %s255 = sadd.s32 %s253, %s254
        %s256 = smul.addr %s255, 4
        %s257 = scalar_lea.vmem %s0, %s256
        %s258 = smul.u32 2, %s21
      $region40: #{tpu_custom_call.1} parent=35 // pred_fallthru
        _
      // Predicated region
      $region41: #{tpu_custom_call.1} parent=35 // pred_check
        %p259 = pneg %p75
      $region42: #{tpu_custom_call.1} parent=35 // pred_check_branch
        %261 = sbr.rel (%p259) target = $region44
      $region43: #{tpu_custom_call.1} parent=35 // pred_region
        %s262 = smul.u32 2, %s21
        %p263 = scmp.lt.s32.totalorder %s20, 1
        %s264 = scalar_select %p263, %s20, 1
        %p265 = scmp.lt.s32.totalorder %s262, 3
        %s266 = scalar_select %p265, %s262, 3
        %s267 = smul.addr %s264, 4
        %s268 = sadd.s32 %s266, %s267
        %s269 = smul.addr %s268, 8
        %s270 = scalar_lea.vmem %s1, %s269
        %s271 = smul.u32 2, %s21
      $region44: #{tpu_custom_call.1} parent=35 // pred_fallthru
        _
    $region36: #{tpu_custom_call.1} parent=5 // pred_fallthru
      _
    %p272 = scmp.le.s32.totalorder 1, %s13
    %p273 = scmp.lt.s32.totalorder %s13, 5
    %p274 = pnand %p272, %p273
    %p275 = pneg %p274
    // Predicated region
    $region45: #{tpu_custom_call.1} parent=5 // pred_check
      _
    $region46: #{tpu_custom_call.1} parent=5 // pred_check_branch
      %277 = sbr.rel (%p274) target = $region48
    $region47: #{tpu_custom_call.1} parent=5 // pred_region
      %s278 = ssub.s32 %s13, 1
      %s279 = smul.u32 2, %s23
      %p280 = scmp.lt.s32.totalorder %s22, 1
      %s281 = scalar_select %p280, %s22, 1
      %p282 = scmp.lt.s32.totalorder %s279, 3
      %s283 = scalar_select %p282, %s279, 3
      %s284 = smul.addr %s281, 4
      %s285 = sadd.s32 %s283, %s284
      %s286 = smul.addr %s285, 4
      %s287 = scalar_lea.vmem %s0, %s286
      %p288 = pneg %p53
      %p289 = pneg %p50
      %s290 = smul.u32 2, %s23
      %p291 = scmp.lt.s32.totalorder %s22, 1
      %s292 = scalar_select %p291, %s22, 1
      %p293 = scmp.lt.s32.totalorder %s290, 3
      %s294 = scalar_select %p293, %s290, 3
      %s295 = smul.addr %s292, 4
      %s296 = sadd.s32 %s294, %s295
      %s297 = smul.addr %s296, 8
      %s298 = scalar_lea.vmem %s1, %s297
      %p299 = pneg %p81
      %p300 = pneg %p78
      %p301 = pneg %p102
      %p302 = pneg %p99
      %p303 = pneg %p123
      %p304 = pneg %p120
      %p305 = pneg %p144
      %p306 = pneg %p141
      %p307 = pneg %p165
      %p308 = pneg %p162
      %p309 = pneg %p186
      %p310 = pneg %p183
      %p311 = pneg %p212
      %p312 = pneg %p209
      %p313 = scmp.lt.s32.totalorder %s22, 1
      %s314 = scalar_select %p313, %s22, 1
      %s315 = smul.addr %s314, 4
      %s316 = scalar_lea.vmem %s7, %s315
      %s317 = smul.u32 2, %s23
      %p318 = scmp.lt.s32.totalorder %s22, 1
      %s319 = scalar_select %p318, %s22, 1
      %p320 = scmp.lt.s32.totalorder %s317, 3
      %s321 = scalar_select %p320, %s317, 3
      %s322 = smul.addr %s319, 4
      %s323 = sadd.s32 %s321, %s322
      %s324 = smul.addr %s323, 4
      %s325 = scalar_lea.vmem %s0, %s324
      %s326 = smul.u32 2, %s23
      %s327 = smul.u32 2, %s23
      %p328 = scmp.lt.s32.totalorder %s22, 1
      %s329 = scalar_select %p328, %s22, 1
      %p330 = scmp.lt.s32.totalorder %s327, 3
      %s331 = scalar_select %p330, %s327, 3
      %s332 = smul.addr %s329, 4
      %s333 = sadd.s32 %s331, %s332
      %s334 = smul.addr %s333, 8
      %s335 = scalar_lea.vmem %s1, %s334
      %s336 = smul.u32 2, %s23
      %p337 = scmp.lt.s32.totalorder %s22, 1
      %s338 = scalar_select %p337, %s22, 1
      %s339 = smul.addr %s338, 4
      %s340 = scalar_lea.vmem %s7, %s339
      %p341 = scmp.eq.s32.totalorder %s23, 0
      // Predicated region
      $region49: #{tpu_custom_call.1} parent=47 // pred_check
        %p342 = pneg %p341
      $region50: #{tpu_custom_call.1} parent=47 // pred_check_branch
        %344 = sbr.rel (%p342) target = $region52
      $region51: #{tpu_custom_call.1} parent=47 // pred_region
        %vm345 = vcmask 3072
        %346 = vst.msk [vmem:[%s340] sm:$0xf] %vm345, 0.0
      $region52: #{tpu_custom_call.1} parent=47 // pred_fallthru
        _
      %v347 = vld [vmem:[%s325] sm:$0xff]
      %v348 = vld [vmem:[%s335] sm:$0x3f]
      %v349 = vld [vmem:[%s335 + $0x8] sm:$0x3f]
      %v350 = vld [vmem:[%s2] sm:$0xf]
      %v351 = vld [vmem:[%s3] sm:$0xf]
      %353 = vset.pattern.permute.xlu0 0
      %354 = vperm.xlu0 %353, %v351
      %v355 = vpop.permute.xlu0 %354
      %v358 = vcombine.high %v347, %v347
      %vm359 = vcmask 31744
      %v361 = vsel %vm359, %v350, 0
      %vm363 = vcmask 1043456
      %v364 = vsel %vm363, %v347, 0
      %v366 = vsel %vm363, %v358, 0
      %368 = vmatprep.subr.mxu0 %v366
      %369 = vmatpush1.msra.mxu0 %v364
      %370 = vmatprep.subr.mxu0 0.0
      %371 = vmatpush1.msra.mxu0 0.0
      %372 = vmatprep.subr.mxu0 0.0
      %373 = vmatpush1.msra.mxu0 0.0
      %374 = vmatprep.subr.mxu0 0.0
      %375 = vmatpush1.msra.mxu0 0.0
      %376 = vmatprep.subr.mxu0 0.0
      %377 = vmatpush1.msra.mxu0 0.0
      %378 = vmatprep.subr.mxu0 0.0
      %379 = vmatpush1.msra.mxu0 0.0
      %380 = vmatprep.subr.mxu0 0.0
      %381 = vmatpush1.msra.mxu0 0.0
      %382 = vmatprep.subr.mxu0 0.0
      %383 = vmatpush1.msra.mxu0 0.0
      %384 = vmatprep.subr.mxu0 0.0
      %385 = vmatpush1.msra.mxu0 0.0
      %386 = vmatprep.subr.mxu0 0.0
      %387 = vmatpush1.msra.mxu0 0.0
      %388 = vmatprep.subr.mxu0 0.0
      %389 = vmatpush1.msra.mxu0 0.0
      %390 = vmatprep.subr.mxu0 0.0
      %391 = vmatpush1.msra.mxu0 0.0
      %392 = vmatprep.subr.mxu0 0.0
      %393 = vmatpush1.msra.mxu0 0.0
      %394 = vmatprep.subr.mxu0 0.0
      %395 = vmatpush1.msra.mxu0 0.0
      %396 = vmatprep.subr.mxu0 0.0
      %397 = vmatpush1.msra.mxu0 0.0
      %398 = vmatprep.subr.mxu0 0.0
      %399 = vmatpush1.msra.mxu0 0.0
      %400 = vmatprep.subr.mxu0 0.0
      %401 = vmatpush1.msra.mxu0 0.0
      %402 = vmatprep.subr.mxu0 0.0
      %403 = vmatpush1.msra.mxu0 0.0
      %404 = vmatprep.subr.mxu0 0.0
      %405 = vmatpush1.msra.mxu0 0.0
      %406 = vmatprep.subr.mxu0 0.0
      %407 = vmatpush1.msra.mxu0 0.0
      %408 = vmatprep.subr.mxu0 0.0
      %409 = vmatpush1.msra.mxu0 0.0
      %410 = vmatprep.subr.mxu0 0.0
      %411 = vmatpush1.msra.mxu0 0.0
      %412 = vmatprep.subr.mxu0 0.0
      %413 = vmatpush1.msra.mxu0 0.0
      %414 = vmatprep.subr.mxu0 0.0
      %415 = vmatpush1.msra.mxu0 0.0
      %416 = vmatprep.subr.mxu0 0.0
      %417 = vmatpush1.msra.mxu0 0.0
      %418 = vmatprep.subr.mxu0 0.0
      %419 = vmatpush1.msra.mxu0 0.0
      %420 = vmatprep.subr.mxu0 0.0
      %421 = vmatpush1.msra.mxu0 0.0
      %422 = vmatprep.subr.mxu0 0.0
      %423 = vmatpush1.msra.mxu0 0.0
      %424 = vmatprep.subr.mxu0 0.0
      %425 = vmatpush1.msra.mxu0 0.0
      %426 = vmatprep.subr.mxu0 0.0
      %427 = vmatpush1.msra.mxu0 0.0
      %428 = vmatprep.subr.mxu0 0.0
      %429 = vmatpush1.msra.mxu0 0.0
      %430 = vmatprep.subr.mxu0 0.0
      %431 = vmatpush1.msra.mxu0 0.0
      %432 = vmatprep.mubr.f32.mxu0 0.0
      %433 = vmatmul.mubr.f32.gmra.mrb[0].mxu0 %v361
      %v434 = vpop.f32.mrb[0].mxu0
      %v435 = vadd.f32 %v355, %v434
      %v436 = vpop.f32.mrb[0].mxu0
      %v437 = vadd.f32 %v355, %v436
      %438 = vdwg.mxu0
      %v439 = vxor.u32 %v435, 2147483648
      %v440 = vxor.u32 %v437, 2147483648
      %v441 = vmul.f32 %v439, 1.442695
      %v442 = vpow.pop %v441
      %v443 = vmul.f32 %v440, 1.442695
      %v444 = vpow.pop %v443
      %v445 = vadd.f32 %v442, 1.0
      %v446 = vadd.f32 %v444, 1.0
      %v447 = vrcp.pop %v445
      %v448 = vmul.f32 1.0, %v447
      %v449 = vrcp.pop %v446
      %v450 = vmul.f32 1.0, %v449
      %v451 = vld [vmem:[%s4] sm:$0x3f]
      %v452 = vld [vmem:[%s5] sm:$0x3f]
      %454 = vset.pattern.permute.xlu0 0
      %455 = vperm.xlu0 %454, %v452
      %v456 = vpop.permute.xlu0 %455
      %vm458 = vcmask 48128
      %v460 = vsel %vm458, %v451, 0
      %vm462 = vcmask 1045504
      %v464 = vsel %vm462, %v348, 0
      %v467 = vsel %vm462, %v349, 0
      %469 = vmatprep.subr.mxu0 %v467
      %470 = vmatpush1.msra.mxu0 %v464
      %471 = vmatprep.subr.mxu0 0.0
      %472 = vmatpush1.msra.mxu0 0.0
      %473 = vmatprep.subr.mxu0 0.0
      %474 = vmatpush1.msra.mxu0 0.0
      %475 = vmatprep.subr.mxu0 0.0
      %476 = vmatpush1.msra.mxu0 0.0
      %477 = vmatprep.subr.mxu0 0.0
      %478 = vmatpush1.msra.mxu0 0.0
      %479 = vmatprep.subr.mxu0 0.0
      %480 = vmatpush1.msra.mxu0 0.0
      %481 = vmatprep.subr.mxu0 0.0
      %482 = vmatpush1.msra.mxu0 0.0
      %483 = vmatprep.subr.mxu0 0.0
      %484 = vmatpush1.msra.mxu0 0.0
      %485 = vmatprep.subr.mxu0 0.0
      %486 = vmatpush1.msra.mxu0 0.0
      %487 = vmatprep.subr.mxu0 0.0
      %488 = vmatpush1.msra.mxu0 0.0
      %489 = vmatprep.subr.mxu0 0.0
      %490 = vmatpush1.msra.mxu0 0.0
      %491 = vmatprep.subr.mxu0 0.0
      %492 = vmatpush1.msra.mxu0 0.0
      %493 = vmatprep.subr.mxu0 0.0
      %494 = vmatpush1.msra.mxu0 0.0
      %495 = vmatprep.subr.mxu0 0.0
      %496 = vmatpush1.msra.mxu0 0.0
      %497 = vmatprep.subr.mxu0 0.0
      %498 = vmatpush1.msra.mxu0 0.0
      %499 = vmatprep.subr.mxu0 0.0
      %500 = vmatpush1.msra.mxu0 0.0
      %501 = vmatprep.subr.mxu0 0.0
      %502 = vmatpush1.msra.mxu0 0.0
      %503 = vmatprep.subr.mxu0 0.0
      %504 = vmatpush1.msra.mxu0 0.0
      %505 = vmatprep.subr.mxu0 0.0
      %506 = vmatpush1.msra.mxu0 0.0
      %507 = vmatprep.subr.mxu0 0.0
      %508 = vmatpush1.msra.mxu0 0.0
      %509 = vmatprep.subr.mxu0 0.0
      %510 = vmatpush1.msra.mxu0 0.0
      %511 = vmatprep.subr.mxu0 0.0
      %512 = vmatpush1.msra.mxu0 0.0
      %513 = vmatprep.subr.mxu0 0.0
      %514 = vmatpush1.msra.mxu0 0.0
      %515 = vmatprep.subr.mxu0 0.0
      %516 = vmatpush1.msra.mxu0 0.0
      %517 = vmatprep.subr.mxu0 0.0
      %518 = vmatpush1.msra.mxu0 0.0
      %519 = vmatprep.subr.mxu0 0.0
      %520 = vmatpush1.msra.mxu0 0.0
      %521 = vmatprep.subr.mxu0 0.0
      %522 = vmatpush1.msra.mxu0 0.0
      %523 = vmatprep.subr.mxu0 0.0
      %524 = vmatpush1.msra.mxu0 0.0
      %525 = vmatprep.subr.mxu0 0.0
      %526 = vmatpush1.msra.mxu0 0.0
      %527 = vmatprep.subr.mxu0 0.0
      %528 = vmatpush1.msra.mxu0 0.0
      %529 = vmatprep.subr.mxu0 0.0
      %530 = vmatpush1.msra.mxu0 0.0
      %531 = vmatprep.subr.mxu0 0.0
      %532 = vmatpush1.msra.mxu0 0.0
      %533 = vmatprep.mubr.f32.mxu0 0.0
      %534 = vmatmul.mubr.f32.gmra.mrb[0].mxu0 %v460
      %v535 = vpop.f32.mrb[0].mxu0
      %v536 = vadd.f32 %v456, %v535
      %v537 = vpop.f32.mrb[0].mxu0
      %v538 = vadd.f32 %v456, %v537
      %539 = vdwg.mxu0
      %v540 = vxor.u32 %v536, 2147483648
      %v541 = vxor.u32 %v538, 2147483648
      %v542 = vmul.f32 %v540, 1.442695
      %v543 = vpow.pop %v542
      %v544 = vmul.f32 %v541, 1.442695
      %v545 = vpow.pop %v544
      %v546 = vadd.f32 %v543, 1.0
      %v547 = vadd.f32 %v545, 1.0
      %v548 = vrcp.pop %v546
      %v549 = vmul.f32 1.0, %v548
      %v550 = vrcp.pop %v547
      %v551 = vmul.f32 1.0, %v550
      %v552 = vld [vmem:[%s6] sm:$0x3f]
      %554 = vset.pattern.permute.xlu0 0
      %555 = vperm.xlu0 %554, %v552
      %v556 = vpop.permute.xlu0 %555
      %v558 = vmul.f32 %v556, %v549
      %v559 = vmul.f32 %v556, %v551
      %v560 = vsel %vm462, %v558, 0.0
      %v561 = vrot.slane %v560, 4
      %v562 = vadd.f32 %v560, %v561
      %v563 = vrot.slane %v562, 2
      %v564 = vadd.f32 %v562, %v563
      %v565 = vrot.slane %v564, 1
      %v566 = vadd.f32 %v564, %v565
      %v567 = vsel %vm462, %v559, 0.0
      %v568 = vrot.slane %v567, 4
      %v569 = vadd.f32 %v567, %v568
      %v570 = vrot.slane %v569, 2
      %v571 = vadd.f32 %v569, %v570
      %v572 = vrot.slane %v571, 1
      %v573 = vadd.f32 %v571, %v572
      %v574 = vld [vmem:[%s340] sm:$0xf]
      %v575 = vmul.f32 %v448, %v566
      %v576 = vmul.f32 %v450, %v573
      %v577 = vsel %vm363, %v575, 0.0
      %v578 = vsel %vm363, %v576, 0.0
      %v579 = vadd.f32 %v577, %v578
      %580 = vadd.xlane.f32.xlu0 %v579
      %v581 = vpop.xlane.xlu0 %580
      %v582 = vadd.f32 %v574, %v581
      %vm583 = vcmask 3072
      %584 = vst.msk [vmem:[%s340] sm:$0xf] %vm583, %v582
      %p585 = scmp.lt.s32.totalorder %s22, 1
      %s586 = scalar_select %p585, %s22, 1
      %s587 = smul.addr %s586, 4
      %s588 = scalar_lea.vmem %s7, %s587
      // Predicated region
      $region53: #{tpu_custom_call.1} parent=47 // pred_check
        %p589 = pneg %p209
      $region54: #{tpu_custom_call.1} parent=47 // pred_check_branch
        %591 = sbr.rel (%p589) target = $region56
      $region55: #{tpu_custom_call.1} parent=47 // pred_region
        _
      $region56: #{tpu_custom_call.1} parent=47 // pred_fallthru
        _
    $region48: #{tpu_custom_call.1} parent=5 // pred_fallthru
      _
    %p592 = scmp.le.s32.totalorder 2, %s13
    // Predicated region
    $region57: #{tpu_custom_call.1} parent=5 // pred_check
      %p593 = pneg %p592
    $region58: #{tpu_custom_call.1} parent=5 // pred_check_branch
      %595 = sbr.rel (%p593) target = $region60
    $region59: #{tpu_custom_call.1} parent=5 // pred_region
      %s596 = ssub.s32 %s13, 2
      // Predicated region
      $region61: #{tpu_custom_call.1} parent=59 // pred_check
        %p597 = pneg %p215
      $region62: #{tpu_custom_call.1} parent=59 // pred_check_branch
        %599 = sbr.rel (%p597) target = $region64
      $region63: #{tpu_custom_call.1} parent=59 // pred_region
        %p600 = scmp.lt.s32.totalorder %s24, 1
        %s601 = scalar_select %p600, %s24, 1
        %s602 = smul.addr %s601, 4
        %s603 = scalar_lea.vmem %s7, %s602
      $region64: #{tpu_custom_call.1} parent=59 // pred_fallthru
        _
    $region60: #{tpu_custom_call.1} parent=5 // pred_fallthru
      _
  $region6: #{tpu_custom_call.1} parent=0 // loop_footer
    %s17 = sadd.s32 1, %s13
  $region7: #{tpu_custom_call.1} parent=0 // loop_footer_branch
    %12 = sbr.rel target = $region3
  $region8: #{tpu_custom_call.1} parent=0 // loop_exit
    _

</llo_original>
